<compile_context>
chip_gen: v7x
topology: tpu7x:2x2x1
jax: 0.10.0
libtpu: 0.0.40
codegen_flags: <defaults>
</compile_context>

<pallas_src>
import numpy as np

import jax
import jax.numpy as jnp
from jax.experimental import pallas as pl
from jax.experimental.pallas import tpu as pltpu


# ----------------------------------------------------------------------------
# pltpu.roll direction probe (guards against rotate-direction convention
# differences across JAX / Mosaic versions).  Runs one tiny kernel, cached.
# ----------------------------------------------------------------------------
_ROLL_NP_LIKE = None


def _roll_is_np_like():
    """True iff pltpu.roll(x, k, axis) == jnp.roll(x, k, axis)."""
    global _ROLL_NP_LIKE
    if _ROLL_NP_LIKE is None:
        def probe(x_ref, o_ref):
            o_ref[...] = pltpu.roll(x_ref[...], 1, axis=1)

        with jax.ensure_compile_time_eval():
            x = jnp.broadcast_to(jnp.arange(128, dtype=jnp.float32), (8, 128))
            out = pl.pallas_call(
                probe,
                out_shape=jax.ShapeDtypeStruct((8, 128), jnp.float32))(x)
            _ROLL_NP_LIKE = bool(out[0, 0] == 127.0)
    return _ROLL_NP_LIKE


def _lane_shift(v, s, n, np_like):
    """Return w with w[..., p] = v[..., (p + s) % n].

    Wrapped lanes are always zeroed by the caller's validity masks, so only the
    in-range positions matter.
    """
    s = s % n
    if s == 0:
        return v
    return pltpu.roll(v, shift=(n - s) if np_like else s, axis=1)


# ----------------------------------------------------------------------------
# Kernel A: 3x3 conv (in-VMEM im2col via lane rolls + one deep-K MXU matmul)
#           + folded eval-mode BN + ReLU, one batch element per grid step.
# ----------------------------------------------------------------------------
def _make_conv_bn_relu_kernel(C2, W, HWP, np_like):
    def kernel(x_ref, mask_ref, w_ref, shift_ref, o_ref, col_ref):
        # x_ref    : (1, C2, HWP) bf16  flattened freq maps (zero-padded tail)
        # mask_ref : (9, HWP)     bf16  per-tap validity masks
        # w_ref    : (C2, 9*C2)   bf16  conv weight, BN scale folded, cols=(tap,cin)
        # shift_ref: (C2, 1)      f32   folded conv-bias + BN shift
        # o_ref    : (1, C2, HWP) f32
        # col_ref  : (9*C2, HWP)  bf16  VMEM scratch (in-kernel im2col)
        x = x_ref[0]
        masks = mask_ref[...]
        for k in range(9):
            dy, dx = divmod(k, 3)
            s = (dy - 1) * W + (dx - 1)
            col_ref[k * C2:(k + 1) * C2, :] = (
                _lane_shift(x, s, HWP, np_like) * masks[k:k + 1, :])
        acc = jnp.dot(w_ref[...], col_ref[...],
                      preferred_element_type=jnp.float32)        # (C2, HWP) f32
        o_ref[0] = jnp.maximum(acc + shift_ref[...], 0.0)

    return kernel


# ----------------------------------------------------------------------------
# Kernel B: ChannelAttention (global avg/max pool + shared 2-layer FC + sigmoid)
#           then SpatialAttention (channel mean/max + 7x7 conv via 49 lane
#           rolls + scalar FMAs + sigmoid), one batch element per grid step.
# ----------------------------------------------------------------------------
def _make_attention_kernel(C, W, HW, HWP, np_like):
    inv_hw = 1.0 / HW
    inv_c = 1.0 / C

    def kernel(x_ref, w1_ref, w2_ref, sa_w_ref, mask_ref, o_ref):
        # x_ref   : (1, C, HWP)  f32   spatial activations (zero-padded tail)
        # w1_ref  : (hidden, C)  f32   CA fc1
        # w2_ref  : (C, hidden)  f32   CA fc2
        # sa_w_ref: (98,)        f32   SMEM: SA 7x7 weights, [cin*49 + dy*7 + dx]
        # mask_ref: (49, HWP)    f32   per-tap validity masks
        # o_ref   : (1, C, HWP)  f32
        x = x_ref[0]

        # ---- ChannelAttention ----
        lane = jax.lax.broadcasted_iota(jnp.int32, (C, HWP), 1)
        avg_c = jnp.sum(x, axis=1, keepdims=True) * inv_hw                # (C,1)
        max_c = jnp.max(jnp.where(lane < HW, x, -jnp.inf),
                        axis=1, keepdims=True)                            # (C,1)
        pooled = jnp.concatenate([avg_c, max_c], axis=1)                  # (C,2)
        h = jnp.maximum(
            jnp.dot(w1_ref[...], pooled, preferred_element_type=jnp.float32),
            0.0)                                                          # (hid,2)
        fc = jnp.dot(w2_ref[...], h, preferred_element_type=jnp.float32)  # (C,2)
        ca = jax.nn.sigmoid(fc[:, 0:1] + fc[:, 1:2])                      # (C,1)
        x1 = x * ca                                                       # (C,HWP)

        # ---- SpatialAttention (7x7 conv on the 2-row map via lane rolls) ----
        avg_s = jnp.sum(x1, axis=0, keepdims=True) * inv_c                # (1,HWP)
        max_s = jnp.max(x1, axis=0, keepdims=True)                        # (1,HWP)
        m = jnp.concatenate([avg_s, max_s], axis=0)                       # (2,HWP)
        masks = mask_ref[...]
        acc = jnp.zeros((1, HWP), jnp.float32)
        for k in range(49):
            dy, dx = divmod(k, 7)
            s = (dy - 3) * W + (dx - 3)
            sh = _lane_shift(m, s, HWP, np_like)                          # (2,HWP)
            tap = sh[0:1, :] * sa_w_ref[k] + sh[1:2, :] * sa_w_ref[49 + k]
            acc = acc + tap * masks[k:k + 1, :]
        sa = jax.nn.sigmoid(acc)                                          # (1,HWP)
        o_ref[0] = x1 * sa                                                # lane-dense

    return kernel


# ----------------------------------------------------------------------------
# Wrapper helpers
# ----------------------------------------------------------------------------
def _shift_masks(H, W, HWP, ksize, dtype):
    """(ksize*ksize, HWP) 0/1 masks: tap (dy,dx) is valid at flattened output p."""
    HW = H * W
    r = ksize // 2
    p = np.arange(HWP)
    y, xc = p // W, p % W
    rows = []
    for dy in range(ksize):
        for dx in range(ksize):
            valid = ((y + dy - r >= 0) & (y + dy - r < H) &
                     (xc + dx - r >= 0) & (xc + dx - r < W) & (p < HW))
            rows.append(valid)
    return jnp.asarray(np.stack(rows, axis=0), dtype=dtype)


# ----------------------------------------------------------------------------
# Wrapper (FFT glue, parameter folding, pallas_call setup)
# ----------------------------------------------------------------------------
def frequency_analysis_branch(x, params):
    """x: (B, C, H, W) float32 (NCHW, like the PyTorch module). Returns NCHW."""
    B, C, H, W = x.shape
    C2, HW = 2 * C, H * W
    HWP = ((HW + 127) // 128) * 128          # pad spatial extent to 128 multiple
    pad = HWP - HW
    hidden = params["ca_w1"].shape[0]
    np_like = _roll_is_np_like()

    # --- frequency transform (XLA glue; no Pallas FFT primitive) ---
    x_fft = jnp.fft.fft2(x)                                      # complex64
    x_freq = jnp.concatenate([x_fft.real, x_fft.imag], axis=1)   # (B, 2C, H, W)
    x_freq = x_freq.reshape(B, C2, HW).astype(jnp.float32)
    if pad:
        x_freq = jnp.pad(x_freq, ((0, 0), (0, 0), (0, pad)))
    x_freq_b16 = x_freq.astype(jnp.bfloat16)     # bf16 MXU operand, f32 accum

    # --- conv weight: reorder cols to (tap, cin), fold BN scale, cast bf16 ---
    eps = 1e-5
    scale = params["bn_gamma"] / jnp.sqrt(params["bn_var"] + eps)          # (C2,)
    w2d = jnp.transpose(params["conv_w"], (0, 2, 3, 1)).reshape(C2, 9 * C2)
    w2d = (w2d * scale[:, None]).astype(jnp.bfloat16)
    shift = ((params["conv_b"] - params["bn_mean"]) * scale
             + params["bn_beta"]).reshape(C2, 1).astype(jnp.float32)

    mask3 = _shift_masks(H, W, HWP, 3, jnp.bfloat16)                       # (9,HWP)

    y = pl.pallas_call(
        _make_conv_bn_relu_kernel(C2, W, HWP, np_like),
        out_shape=jax.ShapeDtypeStruct((B, C2, HWP), jnp.float32),
        grid=(B,),
        in_specs=[
            pl.BlockSpec((1, C2, HWP), lambda b: (b, 0, 0)),
            pl.BlockSpec((9, HWP), lambda b: (0, 0)),
            pl.BlockSpec((C2, 9 * C2), lambda b: (0, 0)),
            pl.BlockSpec((C2, 1), lambda b: (0, 0)),
        ],
        out_specs=pl.BlockSpec((1, C2, HWP), lambda b: (b, 0, 0)),
        scratch_shapes=[pltpu.VMEM((9 * C2, HWP), jnp.bfloat16)],
        compiler_params=pltpu.CompilerParams(
            dimension_semantics=("parallel",),
            vmem_limit_bytes=32 * 1024 * 1024),
    )(x_freq_b16, mask3, w2d, shift)

    # --- back to spatial domain (XLA glue) ---
    y = y[:, :, :HW].reshape(B, C2, H, W)
    x_spatial = jnp.fft.ifft2(y[:, :C] + 1j * y[:, C:]).real.astype(jnp.float32)
    x_flat = x_spatial.reshape(B, C, HW)
    if pad:
        x_flat = jnp.pad(x_flat, ((0, 0), (0, 0), (0, pad)))

    # Attention parameters
    w1 = params["ca_w1"].astype(jnp.float32)                     # (hidden, C)
    w2 = params["ca_w2"].astype(jnp.float32)                     # (C, hidden)
    sa_w = params["sa_w"].reshape(-1).astype(jnp.float32)        # (98,) [cin,dy,dx]
    mask7 = _shift_masks(H, W, HWP, 7, jnp.float32)              # (49, HWP)

    out = pl.pallas_call(
        _make_attention_kernel(C, W, HW, HWP, np_like),
        out_shape=jax.ShapeDtypeStruct((B, C, HWP), jnp.float32),
        grid=(B,),
        in_specs=[
            pl.BlockSpec((1, C, HWP), lambda b: (b, 0, 0)),
            pl.BlockSpec((hidden, C), lambda b: (0, 0)),
            pl.BlockSpec((C, hidden), lambda b: (0, 0)),
            pl.BlockSpec(memory_space=pltpu.MemorySpace.SMEM),   # SA 7x7 weights
            pl.BlockSpec((49, HWP), lambda b: (0, 0)),
        ],
        out_specs=pl.BlockSpec((1, C, HWP), lambda b: (b, 0, 0)),
        compiler_params=pltpu.CompilerParams(
            dimension_semantics=("parallel",),
            vmem_limit_bytes=32 * 1024 * 1024),
    )(x_flat, w1, w2, sa_w, mask7)

    return out[:, :, :HW].reshape(B, C, H, W)                    # already NCHW


# ----------------------------------------------------------------------------
# Deterministic parameter init (shapes from the PyTorch __init__)
# ----------------------------------------------------------------------------
def init_params(key, in_channels, ratio=16):
    C = in_channels
    C2 = 2 * C
    hidden = C // ratio
    assert hidden >= 1, "in_channels must be >= ratio for ChannelAttention"
    ks = jax.random.split(key, 9)
    return {
        # nn.Conv2d(2C, 2C, 3, padding=1)
        "conv_w": jax.random.normal(ks[0], (C2, C2, 3, 3), jnp.float32) * 0.05,
        "conv_b": jax.random.normal(ks[1], (C2,), jnp.float32) * 0.05,
        # nn.BatchNorm2d(2C) (eval mode: affine params + running stats)
        "bn_gamma": 1.0 + 0.1 * jax.random.normal(ks[2], (C2,), jnp.float32),
        "bn_beta": 0.1 * jax.random.normal(ks[3], (C2,), jnp.float32),
        "bn_mean": 0.1 * jax.random.normal(ks[4], (C2,), jnp.float32),
        "bn_var": jax.random.uniform(ks[5], (C2,), jnp.float32, 0.5, 1.5),
        # ChannelAttention fc: Conv2d(C, C//r, 1) and Conv2d(C//r, C, 1), no bias
        "ca_w1": jax.random.normal(ks[6], (hidden, C), jnp.float32) * 0.1,
        "ca_w2": jax.random.normal(ks[7], (C, hidden), jnp.float32) * 0.1,
        # SpatialAttention: Conv2d(2, 1, 7, padding=3), no bias
        "sa_w": jax.random.normal(ks[8], (1, 2, 7, 7), jnp.float32) * 0.1,
    }


if __name__ == "__main__":
    key = jax.random.PRNGKey(0)
    B, C, H, W = 2, 32, 16, 16        # in_channels=32 -> hidden = 32//16 = 2
    k_x, k_p = jax.random.split(key)
    params = init_params(k_p, C)
    x = jax.random.normal(k_x, (B, C, H, W), jnp.float32)

    _roll_is_np_like()                # prime the roll-direction probe eagerly

    fn = jax.jit(lambda xx: frequency_analysis_branch(xx, params))
    out = fn(x)
    jax.block_until_ready(out)
    assert out.shape == (B, C, H, W) and out.dtype == jnp.float32
    print("KERNEL_OK")
</pallas_src>

<mosaic_0001>
module attributes {stable_mosaic.version = 11 : i64} {
  func.func @probe(%arg0: memref<8x128xf32, #tpu.memory_space<vmem>>, %arg1: memref<8x128xf32, #tpu.memory_space<vmem>>) attributes {dimension_semantics = [], scalar_prefetch = 0 : i64, scratch_operands = 0 : i64, tpu.core_type = #tpu.core_type<tc>} {
    %c0 = arith.constant 0 : index
    %c0_0 = arith.constant 0 : index
    %0 = vector.load %arg0[%c0, %c0_0] : memref<8x128xf32, #tpu.memory_space<vmem>>, vector<8x128xf32>
    %c1_i32 = arith.constant 1 : i32
    %1 = tpu.dynamic_rotate %0 by %c1_i32 dim 1 : vector<8x128xf32>, i32 -> vector<8x128xf32>
    %c0_1 = arith.constant 0 : index
    %c0_2 = arith.constant 0 : index
    %2 = vector.load %arg1[%c0_1, %c0_2] : memref<8x128xf32, #tpu.memory_space<vmem>>, vector<8x128xf32>
    tpu.vector_store %arg1[%c0_1, %c0_2], %1 {strides = array<i32>} : memref<8x128xf32, #tpu.memory_space<vmem>>, vector<8x128xf32>,
    return
  }
}

</mosaic_0001>

<llo_original>
// kernel: tpu_custom_call.1
$region0: #{tpu_custom_call.1}
  #allocation0 [shape = 'u32[]', space=smem, size = 0x4, offset = 0x4, fixed_abs, tag = 'smem constant byte address 0x4 - core index']
  #allocation1 [shape = 'u32[144,128]{1,0:T(1,128)}', space=vmem, size = 0x12000, scoped, tag = 'internal scratch']
  %s0 = inlined_call_operand.hbm [shape: f32[8,128], index: 0, kind: input, shape index: {}]
  %s1 = inlined_call_operand.hbm [shape: f32[8,128], index: 1, kind: output, shape index: {}]
  %s2 = sld [smem:[#allocation0]]
  $region18: #{tpu_custom_call.1} parent=0
    _
  %s4 = ssub.s32 1, %s2
  %s5 = scalar_select 0, %s4, %s2
  $region1: #{tpu_custom_call.1} parent=0
    #allocation2 [shape = 'u8[4096]{0}', space=vmem, size = 0x1000, scoped, tag = 'input window, operand 0, single buffered']
    #allocation3 [shape = 's32[1]{0}', space=sflag, size = 0x4, scoped, tag = 'scoped memory for tpu_custom_call.1']
    #allocation4 [shape = 's32[1]{0}', space=sflag, size = 0x4, scoped, tag = 'scoped memory for tpu_custom_call.1']
    #allocation5 [shape = 'u8[4096]{0}', space=vmem, size = 0x1000, scoped, tag = 'output window, operand 0, single buffered']
    %6 = vsyncpa [#allocation3], 0
    %7 = vsyncpa [#allocation4], 0
    // Predicated region
    $region2: #{tpu_custom_call.1} parent=1 // pred_check
      _
    $region3: #{tpu_custom_call.1} parent=1 // pred_check_branch
      %9 = sbr.rel (0) target = $region5
    $region4: #{tpu_custom_call.1} parent=1 // pred_region
      %s11 = ssub.s32 128, 128
      %12 = vsyncadd [#allocation3], %s11
      %s14 = sshll.u32 [#allocation2], 4
      %s15 = int_to_ptr.vmem [resolvable:$true] %s14
      %17 = dma.hbm_to_vmem [thread:$0]  %s0, 128, %s15, [#allocation3]
    $region5: #{tpu_custom_call.1} parent=1 // pred_fallthru
      _
    // Predicated region
    $region6: #{tpu_custom_call.1} parent=1 // pred_check
      _
    $region7: #{tpu_custom_call.1} parent=1 // pred_check_branch
      %19 = sbr.rel (0) target = $region9
    $region8: #{tpu_custom_call.1} parent=1 // pred_region
      %20 = dma.done [#allocation3], 128
    $region9: #{tpu_custom_call.1} parent=1 // pred_fallthru
      _
    %v21 = vld [vmem:[#allocation2] sm:$0xff]
    %22 = vrot.lane.b32.xlu0 %v21, 1
    %v23 = vpop.permute.xlu0 %22
    %24 = vst [vmem:[#allocation5] sm:$0xff] %v23
    // Predicated region
    $region10: #{tpu_custom_call.1} parent=1 // pred_check
      _
    $region11: #{tpu_custom_call.1} parent=1 // pred_check_branch
      %26 = sbr.rel (0) target = $region13
    $region12: #{tpu_custom_call.1} parent=1 // pred_region
      %s28 = ssub.s32 128, 128
      %29 = vsyncadd [#allocation4], %s28
      %s31 = sshll.u32 [#allocation5], 4
      %s32 = int_to_ptr.vmem [resolvable:$true] %s31
      %34 = dma.vmem_to_hbm [thread:$0]  %s32, 128, %s1, [#allocation4]
    $region13: #{tpu_custom_call.1} parent=1 // pred_fallthru
      _
    // Predicated region
    $region14: #{tpu_custom_call.1} parent=1 // pred_check
      _
    $region15: #{tpu_custom_call.1} parent=1 // pred_check_branch
      %36 = sbr.rel (0) target = $region17
    $region16: #{tpu_custom_call.1} parent=1 // pred_region
      %37 = dma.done [#allocation4], 128
    $region17: #{tpu_custom_call.1} parent=1 // pred_fallthru
      _
    %38 = vsyncpa [#allocation3], 1
    %39 = vsyncpa [#allocation4], 1

</llo_original>
